<compile_context>
chip_gen: v7x
topology: tpu7x:2x2x1
jax: 0.10.0
libtpu: 0.0.40
codegen_flags: <defaults>
</compile_context>

<pallas_src>
import math
import jax
import jax.numpy as jnp
from jax import lax
from jax.experimental import pallas as pl
from jax.experimental.pallas import tpu as pltpu

_SUB = 8
_LANE = 128
_VMEM_TILE_BUDGET = 36 * 1024 * 1024   # working set we size tiles against
_VMEM_LIMIT_CAP = 48 * 1024 * 1024     # scoped-VMEM limit cap (safe on v7x 64 MiB)


def _round_up(x, m):
    return ((x + m - 1) // m) * m


# ---------------------------------------------------------------------------
# Activation (Python-float constants only -> nothing is captured as a tracer)
# ---------------------------------------------------------------------------
def _gelu_exact(h):
    # torch.nn.GELU default: 0.5*x*(1+erf(x/sqrt(2)))
    return 0.5 * h * (1.0 + lax.erf(h * 0.7071067811865476))


def _gelu_tanh(h):
    # torch.nn.GELU(approximate="tanh"); tanh runs on the EUP slot.
    return 0.5 * h * (1.0 + jnp.tanh(0.7978845608028654 * (h + 0.044715 * (h * h * h))))


# ---------------------------------------------------------------------------
# Kernels
# ---------------------------------------------------------------------------
def _make_fused_kernel(compute_dtype, approx_gelu):
    act = _gelu_tanh if approx_gelu else _gelu_exact

    def kernel(x_ref, w1_ref, b1_ref, w2_ref, b2_ref, o_ref):
        # x_ref: (tm, Cp)  w1_ref: (Cp, Hp)  b1_ref: (1, Hp)
        # w2_ref: (Hp, Op) b2_ref: (1, Op)   o_ref: (tm, Op)
        x = x_ref[...].astype(compute_dtype)
        h = jnp.dot(x, w1_ref[...], preferred_element_type=jnp.float32) + b1_ref[...]
        h = act(h)
        y = jnp.dot(h.astype(compute_dtype), w2_ref[...],
                    preferred_element_type=jnp.float32) + b2_ref[...]
        o_ref[...] = y.astype(o_ref.dtype)

    return kernel


def _make_chunked_kernel(compute_dtype, approx_gelu):
    act = _gelu_tanh if approx_gelu else _gelu_exact

    def kernel(x_ref, w1_ref, b1_ref, w2_ref, b2_ref, o_ref, acc_ref):
        # x_ref: (tm, Cp)  w1_ref: (Cp, th)  b1_ref: (1, th)
        # w2_ref: (th, Op) b2_ref: (1, Op)   o_ref: (tm, Op)  acc_ref: (tm, Op) f32
        k = pl.program_id(1)

        @pl.when(k == 0)
        def _init():
            acc_ref[...] = jnp.zeros_like(acc_ref)

        x = x_ref[...].astype(compute_dtype)
        h = jnp.dot(x, w1_ref[...], preferred_element_type=jnp.float32) + b1_ref[...]
        h = act(h)
        acc_ref[...] += jnp.dot(h.astype(compute_dtype), w2_ref[...],
                                preferred_element_type=jnp.float32)

        @pl.when(k == pl.num_programs(1) - 1)
        def _finalize():
            o_ref[...] = (acc_ref[...] + b2_ref[...]).astype(o_ref.dtype)

    return kernel


# ---------------------------------------------------------------------------
# Tile / VMEM sizing helpers
# ---------------------------------------------------------------------------
def _choose_tm(M, tm_target):
    """Token tile: sublane-aligned, >=2 tiles when possible (v7x megacore),
    prefers an exact divisor of the 8-aligned token count (no token padding)."""
    M_sub = _round_up(M, _SUB)
    t_max = max(_SUB, min(_round_up(tm_target, _SUB), M_sub))
    if M_sub >= 2 * _SUB:
        t_max = min(t_max, _round_up(M_sub // 2, _SUB))
    t_floor = max(_SUB, ((3 * t_max) // 4) // _SUB * _SUB)
    for t in range(t_max, t_floor - 1, -_SUB):
        if M_sub % t == 0:
            return t
    return t_max


def _choose_th(H_lane, th_target):
    """Hidden chunk: largest 128-multiple divisor of the padded hidden dim."""
    t_max = max(_LANE, min(_round_up(th_target, _LANE), H_lane))
    for t in range(t_max, _LANE - 1, -_LANE):
        if H_lane % t == 0:
            return t
    return _LANE


def _weights_fixed_bytes(C_p, th, O_p, w_itemsize):
    # double-buffered W1/W2 chunks + biases
    return 2 * (C_p * th + th * O_p) * w_itemsize + 2 * (th + O_p) * 4


def _per_row_bytes(C_p, th, O_p, x_itemsize, out_itemsize, w_itemsize, chunked):
    # double-buffered x/out rows, GELU intermediate (f32 + cast copy), acc scratch
    b = 2 * C_p * x_itemsize + 2 * O_p * out_itemsize + th * (4 + w_itemsize)
    if chunked:
        b += O_p * 4
    return b


# ---------------------------------------------------------------------------
# Forward wrapper
# ---------------------------------------------------------------------------
def mlp_forward(x, w1, b1, w2, b2, *, tm=768, th=512,
                compute_dtype=jnp.bfloat16, approx_gelu=False,
                weights_resident=None, vmem_limit_bytes=None):
    """x: (B, N, C). w1: (C, H), b1: (H,), w2: (H, O), b2: (O,). Returns (B, N, O)."""
    B, N, C = x.shape
    H = w1.shape[1]
    O = w2.shape[1]
    M = B * N
    out_dtype = x.dtype

    x_itemsize = jnp.dtype(x.dtype).itemsize
    w_itemsize = jnp.dtype(compute_dtype).itemsize
    out_itemsize = jnp.dtype(out_dtype).itemsize

    # Feature dims padded to lane multiples (lane-dense vector loads/stores).
    C_p = _round_up(C, _LANE)
    O_p = _round_up(O, _LANE)
    H_p = _round_up(H, _LANE)

    # --- decide weights-resident fast path (single hidden chunk) ------------
    tm_nominal = max(_SUB, min(_round_up(tm, _SUB), _round_up(M, _SUB)))
    resident_need = (_weights_fixed_bytes(C_p, H_p, O_p, w_itemsize)
                     + tm_nominal * _per_row_bytes(C_p, H_p, O_p, x_itemsize,
                                                   out_itemsize, w_itemsize, False))
    if weights_resident is None:
        weights_resident = resident_need <= _VMEM_TILE_BUDGET

    th_eff = H_p if weights_resident else _choose_th(H_p, th)
    chunked = not weights_resident

    # --- cap the token tile by the VMEM budget, then pick it ---------------
    fixed = _weights_fixed_bytes(C_p, th_eff, O_p, w_itemsize)
    per_row = _per_row_bytes(C_p, th_eff, O_p, x_itemsize, out_itemsize,
                             w_itemsize, chunked)
    if fixed < _VMEM_TILE_BUDGET:
        max_tm = max(_SUB, ((_VMEM_TILE_BUDGET - fixed) // per_row) // _SUB * _SUB)
    else:
        max_tm = _SUB
    tm_eff = _choose_tm(M, min(tm, max_tm))
    M_p = _round_up(_round_up(M, _SUB), tm_eff)

    est_vmem = fixed + tm_eff * per_row + (2 << 20)
    if vmem_limit_bytes is None:
        vmem_limit_bytes = min(_VMEM_LIMIT_CAP, max(32 << 20, int(est_vmem * 1.3)))

    # --- pad operands only when needed (padding contributes exact zeros) ----
    xf = x.reshape(M, C)
    if (M_p, C_p) != (M, C):
        xf = jnp.pad(xf, ((0, M_p - M), (0, C_p - C)))
    w1_p = w1.astype(compute_dtype)
    if (C_p, H_p) != (C, H):
        w1_p = jnp.pad(w1_p, ((0, C_p - C), (0, H_p - H)))
    b1_p = b1.astype(jnp.float32)
    if H_p != H:
        b1_p = jnp.pad(b1_p, ((0, H_p - H),))
    b1_p = b1_p.reshape(1, H_p)
    w2_p = w2.astype(compute_dtype)
    if (H_p, O_p) != (H, O):
        w2_p = jnp.pad(w2_p, ((0, H_p - H), (0, O_p - O)))
    b2_p = b2.astype(jnp.float32)
    if O_p != O:
        b2_p = jnp.pad(b2_p, ((0, O_p - O),))
    b2_p = b2_p.reshape(1, O_p)

    # --- build the pallas_call ----------------------------------------------
    if weights_resident:
        grid = (M_p // tm_eff,)
        in_specs = [
            pl.BlockSpec((tm_eff, C_p), lambda i: (i, 0)),
            pl.BlockSpec((C_p, H_p), lambda i: (0, 0)),   # resident: DMA'd once
            pl.BlockSpec((1, H_p), lambda i: (0, 0)),
            pl.BlockSpec((H_p, O_p), lambda i: (0, 0)),
            pl.BlockSpec((1, O_p), lambda i: (0, 0)),
        ]
        out_specs = pl.BlockSpec((tm_eff, O_p), lambda i: (i, 0))
        scratch_shapes = []
        kernel = _make_fused_kernel(compute_dtype, approx_gelu)
        dim_sem = ("parallel",)
        weight_passes = 1
    else:
        grid = (M_p // tm_eff, H_p // th_eff)
        in_specs = [
            pl.BlockSpec((tm_eff, C_p), lambda i, k: (i, 0)),   # held across k
            pl.BlockSpec((C_p, th_eff), lambda i, k: (0, k)),   # streamed
            pl.BlockSpec((1, th_eff), lambda i, k: (0, k)),
            pl.BlockSpec((th_eff, O_p), lambda i, k: (k, 0)),   # streamed
            pl.BlockSpec((1, O_p), lambda i, k: (0, 0)),
        ]
        out_specs = pl.BlockSpec((tm_eff, O_p), lambda i, k: (i, 0))
        scratch_shapes = [pltpu.VMEM((tm_eff, O_p), jnp.float32)]
        kernel = _make_chunked_kernel(compute_dtype, approx_gelu)
        dim_sem = ("parallel", "arbitrary")
        weight_passes = M_p // tm_eff   # weights re-streamed once per token tile

    cost = pl.CostEstimate(
        flops=2 * M_p * (C_p * H_p + H_p * O_p),
        transcendentals=M_p * H_p,
        bytes_accessed=(M_p * C_p * x_itemsize
                        + M_p * O_p * out_itemsize
                        + weight_passes * (C_p * H_p + H_p * O_p) * w_itemsize
                        + (H_p + O_p) * 4),
    )

    out = pl.pallas_call(
        kernel,
        out_shape=jax.ShapeDtypeStruct((M_p, O_p), out_dtype),
        grid_spec=pltpu.PrefetchScalarGridSpec(
            num_scalar_prefetch=0,
            grid=grid,
            in_specs=in_specs,
            out_specs=out_specs,
            scratch_shapes=scratch_shapes,
        ),
        compiler_params=pltpu.CompilerParams(
            dimension_semantics=dim_sem,
            vmem_limit_bytes=vmem_limit_bytes,
        ),
        cost_estimate=cost,
    )(xf, w1_p, b1_p, w2_p, b2_p)

    if (M_p, O_p) != (M, O):
        out = out[:M, :O]
    return out.reshape(B, N, O)


# ---------------------------------------------------------------------------
# Parameter init mimicking nn.Linear defaults (stored as (in, out) so x @ W)
# ---------------------------------------------------------------------------
def init_mlp_params(key, in_features, hidden_features, out_features):
    k1, k2, k3, k4 = jax.random.split(key, 4)
    bound1 = 1.0 / math.sqrt(in_features)
    bound2 = 1.0 / math.sqrt(hidden_features)
    w1 = jax.random.uniform(k1, (in_features, hidden_features), jnp.float32,
                            -bound1, bound1)
    b1 = jax.random.uniform(k2, (hidden_features,), jnp.float32, -bound1, bound1)
    w2 = jax.random.uniform(k3, (hidden_features, out_features), jnp.float32,
                            -bound2, bound2)
    b2 = jax.random.uniform(k4, (out_features,), jnp.float32, -bound2, bound2)
    return w1, b1, w2, b2


if __name__ == "__main__":
    key = jax.random.PRNGKey(0)
    kx, kp = jax.random.split(key)

    B, N = 2, 64          # batch, tokens
    C_in = 32             # in_features
    C_hidden = 256        # hidden_features
    C_out = 32            # out_features (defaults to in_features in the module)

    x = jax.random.normal(kx, (B, N, C_in), dtype=jnp.float32)
    w1, b1, w2, b2 = init_mlp_params(kp, C_in, C_hidden, C_out)

    # Path 1: auto (weights-resident fast path at these small shapes).
    y_fused = jax.block_until_ready(mlp_forward(x, w1, b1, w2, b2))
    assert y_fused.shape == (B, N, C_out)

    # Path 2: forced hidden-chunked path, exercising the k reduction axis.
    y_chunk = jax.block_until_ready(
        mlp_forward(x, w1, b1, w2, b2, weights_resident=False, tm=64, th=128))
    assert y_chunk.shape == (B, N, C_out)

    # Reference with the same bf16-in / f32-accumulate recipe as the kernel.
    xb = x.reshape(-1, C_in).astype(jnp.bfloat16)
    h_ref = jnp.dot(xb, w1.astype(jnp.bfloat16),
                    preferred_element_type=jnp.float32) + b1
    h_ref = 0.5 * h_ref * (1.0 + lax.erf(h_ref * 0.7071067811865476))
    y_ref = jnp.dot(h_ref.astype(jnp.bfloat16), w2.astype(jnp.bfloat16),
                    preferred_element_type=jnp.float32) + b2
    y_ref = y_ref.reshape(B, N, C_out)

    assert jnp.allclose(y_fused, y_ref, atol=1e-2, rtol=1e-2), \
        float(jnp.max(jnp.abs(y_fused - y_ref)))
    assert jnp.allclose(y_chunk, y_ref, atol=1e-2, rtol=1e-2), \
        float(jnp.max(jnp.abs(y_chunk - y_ref)))
    assert jnp.allclose(y_fused, y_chunk, atol=1e-2, rtol=1e-2), \
        float(jnp.max(jnp.abs(y_fused - y_chunk)))

    # Looser sanity check against the pure-f32 math of the PyTorch module.
    hf = x.reshape(-1, C_in) @ w1 + b1
    hf = 0.5 * hf * (1.0 + lax.erf(hf * 0.7071067811865476))
    yf = (hf @ w2 + b2).reshape(B, N, C_out)
    assert jnp.allclose(y_fused, yf, atol=5e-2, rtol=5e-2), \
        float(jnp.max(jnp.abs(y_fused - yf)))

    print("KERNEL_OK")
</pallas_src>

<mosaic_0001>
module attributes {stable_mosaic.version = 11 : i64} {
  func.func @kernel(%arg0: i32, %arg1: memref<64x128xf32, #tpu.memory_space<vmem>>, %arg2: memref<128x256xbf16, #tpu.memory_space<vmem>>, %arg3: memref<1x256xf32, #tpu.memory_space<vmem>>, %arg4: memref<256x128xbf16, #tpu.memory_space<vmem>>, %arg5: memref<1x128xf32, #tpu.memory_space<vmem>>, %arg6: memref<64x128xf32, #tpu.memory_space<vmem>>) attributes {dimension_semantics = [#tpu.dimension_semantics<parallel>], iteration_bounds = array<i64: 2>, scalar_prefetch = 0 : i64, scratch_operands = 0 : i64, tpu.core_type = #tpu.core_type<tc>, window_params = [{transform_indices = @transform_0, window_bounds = array<i64: 64, 128>}, {pipeline_mode = #tpu.pipeline_mode<synchronous>, transform_indices = @transform_1, window_bounds = array<i64: 128, 256>}, {pipeline_mode = #tpu.pipeline_mode<synchronous>, transform_indices = @transform_2, window_bounds = array<i64: 1, 256>}, {pipeline_mode = #tpu.pipeline_mode<synchronous>, transform_indices = @transform_3, window_bounds = array<i64: 256, 128>}, {pipeline_mode = #tpu.pipeline_mode<synchronous>, transform_indices = @transform_4, window_bounds = array<i64: 1, 128>}, {transform_indices = @transform_5, window_bounds = array<i64: 64, 128>}]} {
    %c0 = arith.constant 0 : index
    %c0_0 = arith.constant 0 : index
    %0 = vector.load %arg1[%c0, %c0_0] : memref<64x128xf32, #tpu.memory_space<vmem>>, vector<64x128xf32>
    %1 = arith.truncf %0 : vector<64x128xf32> to vector<64x128xbf16>
    %c0_1 = arith.constant 0 : index
    %c0_2 = arith.constant 0 : index
    %2 = vector.load %arg2[%c0_1, %c0_2] : memref<128x256xbf16, #tpu.memory_space<vmem>>, vector<128x256xbf16>
    %cst = arith.constant dense<0.000000e+00> : vector<64x256xf32>
    %3 = tpu.matmul %1, %2, %cst {dimension_numbers = #tpu.dot_dimension_numbers<[1], [0], [0], [1], [0, 0, 1, 1], [], []>} : vector<64x128xbf16>, vector<128x256xbf16>, vector<64x256xf32> -> vector<64x256xf32>
    %c0_3 = arith.constant 0 : index
    %c0_4 = arith.constant 0 : index
    %4 = vector.load %arg3[%c0_3, %c0_4] : memref<1x256xf32, #tpu.memory_space<vmem>>, vector<1x256xf32>
    %5 = vector.broadcast %4 : vector<1x256xf32> to vector<64x256xf32>
    %6 = arith.addf %3, %5 : vector<64x256xf32>
    %cst_5 = arith.constant 5.000000e-01 : f32
    %7 = vector.broadcast %cst_5 : f32 to vector<64x256xf32>
    %8 = arith.mulf %7, %6 : vector<64x256xf32>
    %cst_6 = arith.constant 0.707106769 : f32
    %9 = vector.broadcast %cst_6 : f32 to vector<64x256xf32>
    %10 = arith.mulf %6, %9 : vector<64x256xf32>
    %11 = math.erf %10 : vector<64x256xf32>
    %cst_7 = arith.constant 1.000000e+00 : f32
    %12 = vector.broadcast %cst_7 : f32 to vector<64x256xf32>
    %13 = arith.addf %12, %11 : vector<64x256xf32>
    %14 = arith.mulf %8, %13 : vector<64x256xf32>
    %15 = arith.truncf %14 : vector<64x256xf32> to vector<64x256xbf16>
    %c0_8 = arith.constant 0 : index
    %c0_9 = arith.constant 0 : index
    %16 = vector.load %arg4[%c0_8, %c0_9] : memref<256x128xbf16, #tpu.memory_space<vmem>>, vector<256x128xbf16>
    %cst_10 = arith.constant dense<0.000000e+00> : vector<64x128xf32>
    %17 = tpu.matmul %15, %16, %cst_10 {dimension_numbers = #tpu.dot_dimension_numbers<[1], [0], [0], [1], [0, 0, 1, 1], [], []>} : vector<64x256xbf16>, vector<256x128xbf16>, vector<64x128xf32> -> vector<64x128xf32>
    %c0_11 = arith.constant 0 : index
    %c0_12 = arith.constant 0 : index
    %18 = vector.load %arg5[%c0_11, %c0_12] : memref<1x128xf32, #tpu.memory_space<vmem>>, vector<1x128xf32>
    %19 = vector.broadcast %18 : vector<1x128xf32> to vector<64x128xf32>
    %20 = arith.addf %17, %19 : vector<64x128xf32>
    %c0_13 = arith.constant 0 : index
    %c0_14 = arith.constant 0 : index
    %21 = vector.load %arg6[%c0_13, %c0_14] : memref<64x128xf32, #tpu.memory_space<vmem>>, vector<64x128xf32>
    tpu.vector_store %arg6[%c0_13, %c0_14], %20 {strides = array<i32>} : memref<64x128xf32, #tpu.memory_space<vmem>>, vector<64x128xf32>,
    return
  }
  func.func @transform_0(%arg0: i32) -> (i32, i32) {
    %c0_i32 = arith.constant 0 : i32
    %c0_i32_0 = arith.constant 0 : i32
    return %arg0, %c0_i32 : i32, i32
  }
  func.func @transform_1(%arg0: i32) -> (i32, i32) {
    %c0_i32 = arith.constant 0 : i32
    %c0_i32_0 = arith.constant 0 : i32
    %c0_i32_1 = arith.constant 0 : i32
    return %c0_i32, %c0_i32_0 : i32, i32
  }
  func.func @transform_2(%arg0: i32) -> (i32, i32) {
    %c0_i32 = arith.constant 0 : i32
    %c0_i32_0 = arith.constant 0 : i32
    %c0_i32_1 = arith.constant 0 : i32
    return %c0_i32, %c0_i32_0 : i32, i32
  }
  func.func @transform_3(%arg0: i32) -> (i32, i32) {
    %c0_i32 = arith.constant 0 : i32
    %c0_i32_0 = arith.constant 0 : i32
    %c0_i32_1 = arith.constant 0 : i32
    return %c0_i32, %c0_i32_0 : i32, i32
  }
  func.func @transform_4(%arg0: i32) -> (i32, i32) {
    %c0_i32 = arith.constant 0 : i32
    %c0_i32_0 = arith.constant 0 : i32
    %c0_i32_1 = arith.constant 0 : i32
    return %c0_i32, %c0_i32_0 : i32, i32
  }
  func.func @transform_5(%arg0: i32) -> (i32, i32) {
    %c0_i32 = arith.constant 0 : i32
    %c0_i32_0 = arith.constant 0 : i32
    return %arg0, %c0_i32 : i32, i32
  }
}

</mosaic_0001>

<llo_original>
// kernel: tpu_custom_call.1
$region0: #{tpu_custom_call.1}
  #allocation0 [shape = 'u32[]', space=smem, size = 0x4, offset = 0x4, fixed_abs, tag = 'smem constant byte address 0x4 - core index']
  #allocation1 [shape = 'u32[144,128]{1,0:T(1,128)}', space=vmem, size = 0x12000, scoped, tag = 'internal scratch']
  %s0 = inlined_call_operand.hbm [shape: f32[128,128], index: 0, kind: input, shape index: {}]
  %s1 = inlined_call_operand.hbm [shape: bf16[128,256], index: 1, kind: input, shape index: {}]
  %s2 = inlined_call_operand.vmem [shape: f32[1,256], index: 2, kind: input, shape index: {}]
  %s3 = inlined_call_operand.hbm [shape: bf16[256,128], index: 3, kind: input, shape index: {}]
  %s4 = inlined_call_operand.vmem [shape: f32[1,128], index: 4, kind: input, shape index: {}]
  %s5 = inlined_call_operand.hbm [shape: f32[128,128], index: 5, kind: output, shape index: {}]
  %s6 = sld [smem:[#allocation0]]
  $region65: #{tpu_custom_call.1} parent=0
    _
  %s8 = ssub.s32 1, %s6
  %s9 = scalar_select 0, %s8, %s6
  $region1: #{tpu_custom_call.1} parent=0
    #allocation2 [shape = 'u8[65536]{0}', space=vmem, size = 0x10000, scoped, tag = 'input window, operand 0']
    #allocation3 [shape = 's32[2]{0}', space=sflag, size = 0x8, scoped, tag = 'scoped memory for tpu_custom_call.1']
    #allocation4 [shape = 's32[2]{0}', space=sflag, size = 0x8, scoped, tag = 'scoped memory for tpu_custom_call.1']
    #allocation5 [shape = 'u8[65536]{0}', space=vmem, size = 0x10000, scoped, tag = 'input window, operand 1, single buffered']
    #allocation6 [shape = 's32[1]{0}', space=sflag, size = 0x4, scoped, tag = 'scoped memory for tpu_custom_call.1']
    #allocation7 [shape = 'u8[65536]{0}', space=vmem, size = 0x10000, scoped, tag = 'input window, operand 3, single buffered']
    #allocation8 [shape = 'u8[65536]{0}', space=vmem, size = 0x10000, scoped, tag = 'output window, operand 0']
    %10 = vsyncpa [#allocation3], 0
    %s11 = scalar_lea.sflag [#allocation3], 1
    %12 = vsyncpa %s11, 0
    %13 = vsyncpa [#allocation6], 0
    %14 = vsyncpa [#allocation4], 0
    %s15 = scalar_lea.sflag [#allocation4], 1
    %16 = vsyncpa %s15, 0
    loop: start=0, step=1, limit=4
    $region2: #{tpu_custom_call.1} parent=1 // loop_pre_header
      _
    $region3: #{tpu_custom_call.1} parent=1 // loop_header
      %s18 = sphi 0, %s22
      %p19 = scmp.ge.s32.totalorder %s18, 4
      %s28 = sphi 0, %s30
      %s31 = sphi 0, %s28
      %s32 = sphi 0, %s31
      %s48 = sphi 0, %s32
      %s52 = sphi 0, %s52
      %s54 = sphi 0, %s52
      %s55 = sphi 0, %s54
      %s69 = sphi 0, %s55
      %s73 = sphi 0, %s73
      %s75 = sphi 0, %s73
      %s76 = sphi 0, %s75
      %s90 = sphi 0, %s76
      %s94 = sphi 0, %s94
      %s96 = sphi 0, %s94
      %s97 = sphi 0, %s96
      %s111 = sphi 0, %s97
      %s115 = sphi 0, %s115
      %s117 = sphi 0, %s115
      %s118 = sphi 0, %s117
      %s132 = sphi 0, %s118
      %s138 = sphi 0, %s140
      %s141 = sphi 0, %s138
      %s142 = sphi 0, %s141
      %s158 = sphi 0, %s142
    $region4: #{tpu_custom_call.1} parent=1 // loop_header_branch
      %21 = sbr.rel (%p19) target = $region8
    $region5: #{tpu_custom_call.1} parent=1 // loop_body
      %s23 = ssub.s32 %s18, 1
      %s24 = ssub.s32 %s18, 2
      %s25 = sadd.s32 %s18, 1
      %s26 = ssub.s32 %s18, %s25
      %p27 = scmp.eq.s32.totalorder %s26, 0
      %s29 = sadd.s32 %s28, 1
      %s30 = scalar_select %p27, %s28, %s29
      %p33 = pneg %p27
      %p34 = scmp.eq.s32.totalorder %s18, 1
      %p35 = por %p33, %p34
      %p36 = scmp.ne.s32.totalorder %s28, %s31
      %p37 = scmp.eq.s32.totalorder %s18, 0
      %p38 = por %p36, %p37
      %p39 = scmp.ne.s32.totalorder %s28, %s31
      %p40 = scmp.eq.s32.totalorder %s23, 1
      %p41 = por %p39, %p40
      %p42 = scmp.ne.s32.totalorder %s31, %s32
      %p43 = scmp.eq.s32.totalorder %s23, 0
      %p44 = por %p42, %p43
      %p45 = scmp.ne.s32.totalorder %s31, %s32
      %p46 = scmp.eq.s32.totalorder %s24, 1
      %p47 = por %p45, %p46
      %p49 = scmp.ne.s32.totalorder %s32, %s48
      %p50 = scmp.eq.s32.totalorder %s24, 0
      %p51 = por %p49, %p50
      %s53 = sadd.s32 %s52, 1
      %p56 = scmp.eq.s32.totalorder %s18, 1
      %p57 = scmp.ne.s32.totalorder %s52, %s54
      %p58 = scmp.eq.s32.totalorder %s18, 0
      %p59 = por %p57, %p58
      %p60 = scmp.ne.s32.totalorder %s52, %s54
      %p61 = scmp.eq.s32.totalorder %s23, 1
      %p62 = por %p60, %p61
      %p63 = scmp.ne.s32.totalorder %s54, %s55
      %p64 = scmp.eq.s32.totalorder %s23, 0
      %p65 = por %p63, %p64
      %p66 = scmp.ne.s32.totalorder %s54, %s55
      %p67 = scmp.eq.s32.totalorder %s24, 1
      %p68 = por %p66, %p67
      %p70 = scmp.ne.s32.totalorder %s55, %s69
      %p71 = scmp.eq.s32.totalorder %s24, 0
      %p72 = por %p70, %p71
      %s74 = sadd.s32 %s73, 1
      %p77 = scmp.eq.s32.totalorder %s18, 1
      %p78 = scmp.ne.s32.totalorder %s73, %s75
      %p79 = scmp.eq.s32.totalorder %s18, 0
      %p80 = por %p78, %p79
      %p81 = scmp.ne.s32.totalorder %s73, %s75
      %p82 = scmp.eq.s32.totalorder %s23, 1
      %p83 = por %p81, %p82
      %p84 = scmp.ne.s32.totalorder %s75, %s76
      %p85 = scmp.eq.s32.totalorder %s23, 0
      %p86 = por %p84, %p85
      %p87 = scmp.ne.s32.totalorder %s75, %s76
      %p88 = scmp.eq.s32.totalorder %s24, 1
      %p89 = por %p87, %p88
      %p91 = scmp.ne.s32.totalorder %s76, %s90
      %p92 = scmp.eq.s32.totalorder %s24, 0
      %p93 = por %p91, %p92
      %s95 = sadd.s32 %s94, 1
      %p98 = scmp.eq.s32.totalorder %s18, 1
      %p99 = scmp.ne.s32.totalorder %s94, %s96
      %p100 = scmp.eq.s32.totalorder %s18, 0
      %p101 = por %p99, %p100
      %p102 = scmp.ne.s32.totalorder %s94, %s96
      %p103 = scmp.eq.s32.totalorder %s23, 1
      %p104 = por %p102, %p103
      %p105 = scmp.ne.s32.totalorder %s96, %s97
      %p106 = scmp.eq.s32.totalorder %s23, 0
      %p107 = por %p105, %p106
      %p108 = scmp.ne.s32.totalorder %s96, %s97
      %p109 = scmp.eq.s32.totalorder %s24, 1
      %p110 = por %p108, %p109
      %p112 = scmp.ne.s32.totalorder %s97, %s111
      %p113 = scmp.eq.s32.totalorder %s24, 0
      %p114 = por %p112, %p113
      %s116 = sadd.s32 %s115, 1
      %p119 = scmp.eq.s32.totalorder %s18, 1
      %p120 = scmp.ne.s32.totalorder %s115, %s117
      %p121 = scmp.eq.s32.totalorder %s18, 0
      %p122 = por %p120, %p121
      %p123 = scmp.ne.s32.totalorder %s115, %s117
      %p124 = scmp.eq.s32.totalorder %s23, 1
      %p125 = por %p123, %p124
      %p126 = scmp.ne.s32.totalorder %s117, %s118
      %p127 = scmp.eq.s32.totalorder %s23, 0
      %p128 = por %p126, %p127
      %p129 = scmp.ne.s32.totalorder %s117, %s118
      %p130 = scmp.eq.s32.totalorder %s24, 1
      %p131 = por %p129, %p130
      %p133 = scmp.ne.s32.totalorder %s118, %s132
      %p134 = scmp.eq.s32.totalorder %s24, 0
      %p135 = por %p133, %p134
      %s136 = ssub.s32 %s18, %s25
      %p137 = scmp.eq.s32.totalorder %s136, 0
      %s139 = sadd.s32 %s138, 1
      %s140 = scalar_select %p137, %s138, %s139
      %p143 = pneg %p137
      %p144 = scmp.eq.s32.totalorder %s18, 1
      %p145 = por %p143, %p144
      %p146 = scmp.ne.s32.totalorder %s138, %s141
      %p147 = scmp.eq.s32.totalorder %s18, 0
      %p148 = por %p146, %p147
      %p149 = scmp.ne.s32.totalorder %s138, %s141
      %p150 = scmp.eq.s32.totalorder %s23, 1
      %p151 = por %p149, %p150
      %p152 = scmp.ne.s32.totalorder %s141, %s142
      %p153 = scmp.eq.s32.totalorder %s23, 0
      %p154 = por %p152, %p153
      %p155 = scmp.ne.s32.totalorder %s141, %s142
      %p156 = scmp.eq.s32.totalorder %s24, 1
      %p157 = por %p155, %p156
      %p159 = scmp.ne.s32.totalorder %s142, %s158
      %p160 = scmp.eq.s32.totalorder %s24, 0
      %p161 = por %p159, %p160
      %p162 = scmp.le.s32.totalorder 1, %s18
      %p163 = scmp.lt.s32.totalorder %s18, 3
      %p164 = pnand %p162, %p163
      %p165 = pneg %p164
      // Predicated region
      $region9: #{tpu_custom_call.1} parent=5 // pred_check
        _
      $region10: #{tpu_custom_call.1} parent=5 // pred_check_branch
        %167 = sbr.rel (%p164) target = $region12
      $region11: #{tpu_custom_call.1} parent=5 // pred_region
        %s168 = ssub.s32 %s18, 1
        // Predicated region
        $region13: #{tpu_custom_call.1} parent=11 // pred_check
          %p169 = pneg %p65
        $region14: #{tpu_custom_call.1} parent=11 // pred_check_branch
          %171 = sbr.rel (%p169) target = $region16
        $region15: #{tpu_custom_call.1} parent=11 // pred_region
          %s173 = ssub.s32 2048, 2048
          %174 = vsyncadd [#allocation6], %s173
          %s175 = sshll.u32 [#allocation5], 4
          %s176 = int_to_ptr.vmem [resolvable:$true] %s175
          %181 = dma.hbm_to_vmem [thread:$0]  %s1, 2048, %s176, [#allocation6], 128, 128, 8
        $region16: #{tpu_custom_call.1} parent=11 // pred_fallthru
          _
        // Predicated region
        $region17: #{tpu_custom_call.1} parent=11 // pred_check
          %p182 = pneg %p86
        $region18: #{tpu_custom_call.1} parent=11 // pred_check_branch
          %184 = sbr.rel (%p182) target = $region20
        $region19: #{tpu_custom_call.1} parent=11 // pred_region
          _
        $region20: #{tpu_custom_call.1} parent=11 // pred_fallthru
          _
        // Predicated region
        $region21: #{tpu_custom_call.1} parent=11 // pred_check
          %p185 = pneg %p107
        $region22: #{tpu_custom_call.1} parent=11 // pred_check_branch
          %187 = sbr.rel (%p185) target = $region24
        $region23: #{tpu_custom_call.1} parent=11 // pred_region
          %s189 = ssub.s32 2048, 2048
          %190 = vsyncadd [#allocation6], %s189
          %s191 = sshll.u32 [#allocation7], 4
          %s192 = int_to_ptr.vmem [resolvable:$true] %s191
          %197 = dma.hbm_to_vmem [thread:$0]  %s3, 2048, %s192, [#allocation6], 64, 64, 4
        $region24: #{tpu_custom_call.1} parent=11 // pred_fallthru
          _
        // Predicated region
        $region25: #{tpu_custom_call.1} parent=11 // pred_check
          %p198 = pneg %p128
        $region26: #{tpu_custom_call.1} parent=11 // pred_check_branch
          %200 = sbr.rel (%p198) target = $region28
        $region27: #{tpu_custom_call.1} parent=11 // pred_region
          _
        $region28: #{tpu_custom_call.1} parent=11 // pred_fallthru
          _
      $region12: #{tpu_custom_call.1} parent=5 // pred_fallthru
        _
      %p201 = scmp.lt.s32.totalorder %s18, 2
      // Predicated region
      $region29: #{tpu_custom_call.1} parent=5 // pred_check
        %p202 = pneg %p201
      $region30: #{tpu_custom_call.1} parent=5 // pred_check_branch
        %204 = sbr.rel (%p202) target = $region32
      $region31: #{tpu_custom_call.1} parent=5 // pred_region
        // Predicated region
        $region33: #{tpu_custom_call.1} parent=31 // pred_check
          %p205 = pneg %p38
        $region34: #{tpu_custom_call.1} parent=31 // pred_check_branch
          %207 = sbr.rel (%p205) target = $region36
        $region35: #{tpu_custom_call.1} parent=31 // pred_region
          %s208 = sand.u32 %s28, 1
          %s209 = scalar_lea.sflag [#allocation3], %s208
          %s210 = sand.u32 %s28, 1
          %s211 = smul.addr %s210, 64
          %s212 = scalar_lea.vmem [#allocation2], %s211
          %s213 = smul.u32 8, %s18
          %s215 = ssub.s32 1024, 1024
          %216 = vsyncadd %s209, %s215
          %s217 = smul.addr %s213, 128
          %s218 = scalar_lea.hbm %s0, %s217
          %s219 = sshll.u32 %s212, 4
          %s220 = int_to_ptr.vmem [resolvable:$true] %s219
          %225 = dma.hbm_to_vmem [thread:$0]  %s218, 1024, %s220, %s209, 128, 128, 8
        $region36: #{tpu_custom_call.1} parent=31 // pred_fallthru
          _
      $region32: #{tpu_custom_call.1} parent=5 // pred_fallthru
        _
      %p226 = scmp.le.s32.totalorder 1, %s18
      %p227 = scmp.lt.s32.totalorder %s18, 3
      %p228 = pnand %p226, %p227
      %p229 = pneg %p228
      // Predicated region
      $region37: #{tpu_custom_call.1} parent=5 // pred_check
        _
      $region38: #{tpu_custom_call.1} parent=5 // pred_check_branch
        %231 = sbr.rel (%p228) target = $region40
      $region39: #{tpu_custom_call.1} parent=5 // pred_region
        %s232 = ssub.s32 %s18, 1
        %s233 = sand.u32 %s31, 1
        %s234 = scalar_lea.sflag [#allocation3], %s233
        %s235 = sand.u32 %s31, 1
        %s236 = smul.addr %s235, 64
        %s237 = scalar_lea.vmem [#allocation2], %s236
        // Predicated region
        $region41: #{tpu_custom_call.1} parent=39 // pred_check
          %p238 = pneg %p44
        $region42: #{tpu_custom_call.1} parent=39 // pred_check_branch
          %240 = sbr.rel (%p238) target = $region44
        $region43: #{tpu_custom_call.1} parent=39 // pred_region
          %241 = dma.done %s234, 1024
        $region44: #{tpu_custom_call.1} parent=39 // pred_fallthru
          _
        // Predicated region
        $region45: #{tpu_custom_call.1} parent=39 // pred_check
          %p242 = pneg %p65
        $region46: #{tpu_custom_call.1} parent=39 // pred_check_branch
          %244 = sbr.rel (%p242) target = $region48
        $region47: #{tpu_custom_call.1} parent=39 // pred_region
          %245 = dma.done [#allocation6], 2048
        $region48: #{tpu_custom_call.1} parent=39 // pred_fallthru
          _
        // Predicated region
        $region49: #{tpu_custom_call.1} parent=39 // pred_check
          %p246 = pneg %p107
        $region50: #{tpu_custom_call.1} parent=39 // pred_check_branch
          %248 = sbr.rel (%p246) target = $region52
        $region51: #{tpu_custom_call.1} parent=39 // pred_region
          %249 = dma.done [#allocation6], 2048
        $region52: #{tpu_custom_call.1} parent=39 // pred_fallthru
          _
        %s250 = sand.u32 %s31, 1
        %s251 = scalar_lea.sflag [#allocation3], %s250
        %s252 = sand.u32 %s31, 1
        %s253 = smul.addr %s252, 64
        %s254 = scalar_lea.vmem [#allocation2], %s253
        %p255 = pneg %p44
        %p256 = pneg %p41
        %p257 = pneg %p65
        %p258 = pneg %p62
        %p259 = pneg %p86
        %p260 = pneg %p83
        %p261 = pneg %p107
        %p262 = pneg %p104
        %p263 = pneg %p128
        %p264 = pneg %p125
        %p265 = pneg %p154
        %p266 = pneg %p151
        %s267 = sand.u32 %s141, 1
        %s268 = scalar_lea.sflag [#allocation4], %s267
        %s269 = sand.u32 %s141, 1
        %s270 = smul.addr %s269, 64
        %s271 = scalar_lea.vmem [#allocation8], %s270
        %s272 = smul.u32 8, %s23
        %s273 = smul.u32 8, %s23
        %v275 = vld [vmem:[%s237] sm:$0xff]
        %v276 = vld [vmem:[%s237 + $0x8] sm:$0xff]
        %v277 = vld [vmem:[%s237 + $0x10] sm:$0xff]
        %v278 = vld [vmem:[%s237 + $0x18] sm:$0xff]
        %v279 = vld [vmem:[%s237 + $0x20] sm:$0xff]
        %v280 = vld [vmem:[%s237 + $0x28] sm:$0xff]
        %v281 = vld [vmem:[%s237 + $0x30] sm:$0xff]
        %v282 = vld [vmem:[%s237 + $0x38] sm:$0xff]
        %v283 = vpack.c.bf16 %v276, %v275
        %v284 = vpack.c.bf16 %v278, %v277
        %v285 = vpack.c.bf16 %v280, %v279
        %v286 = vpack.c.bf16 %v282, %v281
        %v287 = vld [vmem:[#allocation5] sm:$0xff]
        %v288 = vld [vmem:[#allocation5 + $0x8] sm:$0xff]
        %v289 = vld [vmem:[#allocation5 + $0x10] sm:$0xff]
        %v290 = vld [vmem:[#allocation5 + $0x18] sm:$0xff]
        %v291 = vld [vmem:[#allocation5 + $0x20] sm:$0xff]
        %v292 = vld [vmem:[#allocation5 + $0x28] sm:$0xff]
        %v293 = vld [vmem:[#allocation5 + $0x30] sm:$0xff]
        %v294 = vld [vmem:[#allocation5 + $0x38] sm:$0xff]
        %v295 = vld [vmem:[#allocation5 + $0x40] sm:$0xff]
        %v296 = vld [vmem:[#allocation5 + $0x48] sm:$0xff]
        %v297 = vld [vmem:[#allocation5 + $0x50] sm:$0xff]
        %v298 = vld [vmem:[#allocation5 + $0x58] sm:$0xff]
        %v299 = vld [vmem:[#allocation5 + $0x60] sm:$0xff]
        %v300 = vld [vmem:[#allocation5 + $0x68] sm:$0xff]
        %v301 = vld [vmem:[#allocation5 + $0x70] sm:$0xff]
        %v302 = vld [vmem:[#allocation5 + $0x78] sm:$0xff]
        %v303 = vld [vmem:[%s2] sm:$0x3]
        %v305 = vlaneseq
        %v306 = vshrl.u32 %v305, 7
        %v307 = vsub.s32 0, %v306
        %v308 = vrot.slane %v303, %v307
        %v309 = vlaneseq
        %v310 = vshrl.u32 %v309, 7
        %v311 = vsub.s32 1, %v310
        %v312 = vrot.slane %v303, %v311
        %v331 = vunpack.c.l.b16 %v287
        %v332 = vunpack.c.h.b16 %v287
        %v333 = vunpack.c.l.b16 %v288
        %v334 = vunpack.c.h.b16 %v288
        %v335 = vunpack.c.l.b16 %v289
        %v336 = vunpack.c.h.b16 %v289
        %v337 = vunpack.c.l.b16 %v290
        %v338 = vunpack.c.h.b16 %v290
        %v339 = vunpack.c.l.b16 %v291
        %v340 = vunpack.c.h.b16 %v291
        %v341 = vunpack.c.l.b16 %v292
        %v342 = vunpack.c.h.b16 %v292
        %v343 = vunpack.c.l.b16 %v293
        %v344 = vunpack.c.h.b16 %v293
        %v345 = vunpack.c.l.b16 %v294
        %v346 = vunpack.c.h.b16 %v294
        %v347 = vunpack.c.l.b16 %v295
        %v348 = vunpack.c.h.b16 %v295
        %v349 = vunpack.c.l.b16 %v296
        %v350 = vunpack.c.h.b16 %v296
        %v351 = vunpack.c.l.b16 %v297
        %v352 = vunpack.c.h.b16 %v297
        %v353 = vunpack.c.l.b16 %v298
        %v354 = vunpack.c.h.b16 %v298
        %v355 = vunpack.c.l.b16 %v299
        %v356 = vunpack.c.h.b16 %v299
        %v357 = vunpack.c.l.b16 %v300
        %v358 = vunpack.c.h.b16 %v300
        %v359 = vunpack.c.l.b16 %v301
        %v360 = vunpack.c.h.b16 %v301
        %v361 = vunpack.c.l.b16 %v302
        %v362 = vunpack.c.h.b16 %v302
        %v363 = vpack.c.b16 %v333, %v331
        %v364 = vpack.c.b16 %v334, %v332
        %v365 = vpack.c.b16 %v337, %v335
        %v366 = vpack.c.b16 %v338, %v336
        %v367 = vpack.c.b16 %v341, %v339
        %v368 = vpack.c.b16 %v342, %v340
        %v369 = vpack.c.b16 %v345, %v343
        %v370 = vpack.c.b16 %v346, %v344
        %v371 = vpack.c.b16 %v349, %v347
        %v372 = vpack.c.b16 %v350, %v348
        %v373 = vpack.c.b16 %v353, %v351
        %v374 = vpack.c.b16 %v354, %v352
        %v375 = vpack.c.b16 %v357, %v355
        %v376 = vpack.c.b16 %v358, %v356
        %v377 = vpack.c.b16 %v361, %v359
        %v378 = vpack.c.b16 %v362, %v360
        %395 = vmatprep.subr.bf16.mxu0 %v364
        %396 = vmatpush1.bf16.msra.mxu0 %v363
        %397 = vmatprep.subr.bf16.mxu0 %v366
        %398 = vmatpush1.bf16.msra.mxu0 %v365
        %399 = vmatprep.subr.bf16.mxu0 %v368
        %400 = vmatpush1.bf16.msra.mxu0 %v367
        %401 = vmatprep.subr.bf16.mxu0 %v370
        %402 = vmatpush1.bf16.msra.mxu0 %v369
        %403 = vmatprep.subr.bf16.mxu0 %v372
        %404 = vmatpush1.bf16.msra.mxu0 %v371
        %405 = vmatprep.subr.bf16.mxu0 %v374
        %406 = vmatpush1.bf16.msra.mxu0 %v373
        %407 = vmatprep.subr.bf16.mxu0 %v376
        %408 = vmatpush1.bf16.msra.mxu0 %v375
        %409 = vmatprep.subr.bf16.mxu0 %v378
        %410 = vmatpush1.bf16.msra.mxu0 %v377
        %411 = vmatprep.subr.bf16.mxu0 0
        %412 = vmatpush1.bf16.msra.mxu0 0
        %413 = vmatprep.subr.bf16.mxu0 0
        %414 = vmatpush1.bf16.msra.mxu0 0
        %415 = vmatprep.subr.bf16.mxu0 0
        %416 = vmatpush1.bf16.msra.mxu0 0
        %417 = vmatprep.subr.bf16.mxu0 0
        %418 = vmatpush1.bf16.msra.mxu0 0
        %419 = vmatprep.subr.bf16.mxu0 0
        %420 = vmatpush1.bf16.msra.mxu0 0
        %421 = vmatprep.subr.bf16.mxu0 0
        %422 = vmatpush1.bf16.msra.mxu0 0
        %423 = vmatprep.subr.bf16.mxu0 0
        %424 = vmatpush1.bf16.msra.mxu0 0
        %425 = vmatprep.subr.bf16.mxu0 0
        %426 = vmatpush1.bf16.msra.mxu0 0
        %427 = vmatprep.mubr.bf16.mxu0 0
        %428 = vmatmul.mubr.bf16.gmra.mrb[0].mxu0 %v283
        %v429 = vpop.f32.mrb[0].mxu0
        %v430 = vadd.f32 %v308, %v429
        %v431 = vpop.f32.mrb[0].mxu0
        %v432 = vadd.f32 %v312, %v431
        %v433 = vpop.f32.mrb[0].mxu0
        %v434 = vadd.f32 %v308, %v433
        %v435 = vpop.f32.mrb[0].mxu0
        %v436 = vadd.f32 %v312, %v435
        %437 = vmatprep.mubr.bf16.mxu0 0
        %438 = vmatmul.mubr.bf16.gmra.mrb[0].mxu0 %v284
        %v439 = vpop.f32.mrb[0].mxu0
        %v440 = vadd.f32 %v308, %v439
        %v441 = vpop.f32.mrb[0].mxu0
        %v442 = vadd.f32 %v312, %v441
        %v443 = vpop.f32.mrb[0].mxu0
        %v444 = vadd.f32 %v308, %v443
        %v445 = vpop.f32.mrb[0].mxu0
        %v446 = vadd.f32 %v312, %v445
        %447 = vmatprep.mubr.bf16.mxu0 0
        %448 = vmatmul.mubr.bf16.gmra.mrb[0].mxu0 %v285
        %v449 = vpop.f32.mrb[0].mxu0
        %v450 = vadd.f32 %v308, %v449
        %v451 = vpop.f32.mrb[0].mxu0
        %v452 = vadd.f32 %v312, %v451
        %v453 = vpop.f32.mrb[0].mxu0
        %v454 = vadd.f32 %v308, %v453
        %v455 = vpop.f32.mrb[0].mxu0
        %v456 = vadd.f32 %v312, %v455
        %457 = vmatprep.mubr.bf16.mxu0 0
        %458 = vmatmul.mubr.bf16.gmra.mrb[0].mxu0 %v286
        %v459 = vpop.f32.mrb[0].mxu0
        %v460 = vadd.f32 %v308, %v459
        %v461 = vpop.f32.mrb[0].mxu0
        %v462 = vadd.f32 %v312, %v461
        %v463 = vpop.f32.mrb[0].mxu0
        %v464 = vadd.f32 %v308, %v463
        %v465 = vpop.f32.mrb[0].mxu0
        %v466 = vadd.f32 %v312, %v465
        %467 = vdwg.mxu0
        %v468 = vmul.f32 %v430, 0.5
        %v469 = vmul.f32 %v432, 0.5
        %v470 = vmul.f32 %v434, 0.5
        %v471 = vmul.f32 %v436, 0.5
        %v472 = vmul.f32 %v440, 0.5
        %v473 = vmul.f32 %v442, 0.5
        %v474 = vmul.f32 %v444, 0.5
        %v475 = vmul.f32 %v446, 0.5
        %v476 = vmul.f32 %v450, 0.5
        %v477 = vmul.f32 %v452, 0.5
        %v478 = vmul.f32 %v454, 0.5
        %v479 = vmul.f32 %v456, 0.5
        %v480 = vmul.f32 %v460, 0.5
        %v481 = vmul.f32 %v462, 0.5
        %v482 = vmul.f32 %v464, 0.5
        %v483 = vmul.f32 %v466, 0.5
        %v484 = vmul.f32 %v430, 0.70710677
        %v485 = vmul.f32 %v432, 0.70710677
        %v486 = vmul.f32 %v434, 0.70710677
        %v487 = vmul.f32 %v436, 0.70710677
        %v488 = vmul.f32 %v440, 0.70710677
        %v489 = vmul.f32 %v442, 0.70710677
        %v490 = vmul.f32 %v444, 0.70710677
        %v491 = vmul.f32 %v446, 0.70710677
        %v492 = vmul.f32 %v450, 0.70710677
        %v493 = vmul.f32 %v452, 0.70710677
        %v494 = vmul.f32 %v454, 0.70710677
        %v495 = vmul.f32 %v456, 0.70710677
        %v496 = vmul.f32 %v460, 0.70710677
        %v497 = vmul.f32 %v462, 0.70710677
        %v498 = vmul.f32 %v464, 0.70710677
        %v499 = vmul.f32 %v466, 0.70710677
        %v500 = verf.f32.pop %v484
        %v501 = verf.f32.pop %v485
        %v502 = verf.f32.pop %v486
        %v503 = verf.f32.pop %v487
        %v504 = verf.f32.pop %v488
        %v505 = verf.f32.pop %v489
        %v506 = verf.f32.pop %v490
        %v507 = verf.f32.pop %v491
        %v508 = verf.f32.pop %v492
        %v509 = verf.f32.pop %v493
        %v510 = verf.f32.pop %v494
        %v511 = verf.f32.pop %v495
        %v512 = verf.f32.pop %v496
        %v513 = verf.f32.pop %v497
        %v514 = verf.f32.pop %v498
        %v515 = verf.f32.pop %v499
        %v516 = vadd.f32 %v500, 1.0
        %v517 = vadd.f32 %v501, 1.0
        %v518 = vadd.f32 %v502, 1.0
        %v519 = vadd.f32 %v503, 1.0
        %v520 = vadd.f32 %v504, 1.0
        %v521 = vadd.f32 %v505, 1.0
        %v522 = vadd.f32 %v506, 1.0
        %v523 = vadd.f32 %v507, 1.0
        %v524 = vadd.f32 %v508, 1.0
        %v525 = vadd.f32 %v509, 1.0
        %v526 = vadd.f32 %v510, 1.0
        %v527 = vadd.f32 %v511, 1.0
        %v528 = vadd.f32 %v512, 1.0
        %v529 = vadd.f32 %v513, 1.0
        %v530 = vadd.f32 %v514, 1.0
        %v531 = vadd.f32 %v515, 1.0
        %v532 = vmul.f32 %v468, %v516
        %v533 = vmul.f32 %v469, %v517
        %v534 = vmul.f32 %v470, %v518
        %v535 = vmul.f32 %v471, %v519
        %v536 = vmul.f32 %v472, %v520
        %v537 = vmul.f32 %v473, %v521
        %v538 = vmul.f32 %v474, %v522
        %v539 = vmul.f32 %v475, %v523
        %v540 = vmul.f32 %v476, %v524
        %v541 = vmul.f32 %v477, %v525
        %v542 = vmul.f32 %v478, %v526
        %v543 = vmul.f32 %v479, %v527
        %v544 = vmul.f32 %v480, %v528
        %v545 = vmul.f32 %v481, %v529
        %v546 = vmul.f32 %v482, %v530
        %v547 = vmul.f32 %v483, %v531
        %v548 = vpack.c.bf16 %v534, %v532
        %v549 = vpack.c.bf16 %v535, %v533
        %v550 = vpack.c.bf16 %v538, %v536
        %v551 = vpack.c.bf16 %v539, %v537
        %v552 = vpack.c.bf16 %v542, %v540
        %v553 = vpack.c.bf16 %v543, %v541
        %v554 = vpack.c.bf16 %v546, %v544
        %v555 = vpack.c.bf16 %v547, %v545
        %v556 = vld [vmem:[#allocation7] sm:$0xf]
        %v557 = vld [vmem:[#allocation7 + $0x4] sm:$0xf]
        %v558 = vld [vmem:[#allocation7 + $0x8] sm:$0xf]
        %v559 = vld [vmem:[#allocation7 + $0xc] sm:$0xf]
        %v560 = vld [vmem:[#allocation7 + $0x10] sm:$0xf]
        %v561 = vld [vmem:[#allocation7 + $0x14] sm:$0xf]
        %v562 = vld [vmem:[#allocation7 + $0x18] sm:$0xf]
        %v563 = vld [vmem:[#allocation7 + $0x1c] sm:$0xf]
        %v564 = vld [vmem:[#allocation7 + $0x20] sm:$0xf]
        %v565 = vld [vmem:[#allocation7 + $0x24] sm:$0xf]
        %v566 = vld [vmem:[#allocation7 + $0x28] sm:$0xf]
        %v567 = vld [vmem:[#allocation7 + $0x2c] sm:$0xf]
        %v568 = vld [vmem:[#allocation7 + $0x30] sm:$0xf]
        %v569 = vld [vmem:[#allocation7 + $0x34] sm:$0xf]
        %v570 = vld [vmem:[#allocation7 + $0x38] sm:$0xf]
        %v571 = vld [vmem:[#allocation7 + $0x3c] sm:$0xf]
        %v572 = vld [vmem:[#allocation7 + $0x40] sm:$0xf]
        %v573 = vld [vmem:[#allocation7 + $0x44] sm:$0xf]
        %v574 = vld [vmem:[#allocation7 + $0x48] sm:$0xf]
        %v575 = vld [vmem:[#allocation7 + $0x4c] sm:$0xf]
        %v576 = vld [vmem:[#allocation7 + $0x50] sm:$0xf]
        %v577 = vld [vmem:[#allocation7 + $0x54] sm:$0xf]
        %v578 = vld [vmem:[#allocation7 + $0x58] sm:$0xf]
        %v579 = vld [vmem:[#allocation7 + $0x5c] sm:$0xf]
        %v580 = vld [vmem:[#allocation7 + $0x60] sm:$0xf]
        %v581 = vld [vmem:[#allocation7 + $0x64] sm:$0xf]
        %v582 = vld [vmem:[#allocation7 + $0x68] sm:$0xf]
        %v583 = vld [vmem:[#allocation7 + $0x6c] sm:$0xf]
        %v584 = vld [vmem:[#allocation7 + $0x70] sm:$0xf]
        %v585 = vld [vmem:[#allocation7 + $0x74] sm:$0xf]
        %v586 = vld [vmem:[#allocation7 + $0x78] sm:$0xf]
        %v587 = vld [vmem:[#allocation7 + $0x7c] sm:$0xf]
        %v588 = vld [vmem:[%s4] sm:$0x1]
        %v590 = vlaneseq
        %v591 = vshrl.u32 %v590, 7
        %v592 = vsub.s32 0, %v591
        %v593 = vrot.slane %v588, %v592
        %v627 = vunpack.c.l.b16 %v556
        %v628 = vunpack.c.l.b16 %v557
        %v629 = vunpack.c.l.b16 %v558
        %v630 = vunpack.c.l.b16 %v559
        %v631 = vunpack.c.l.b16 %v560
        %v632 = vunpack.c.l.b16 %v561
        %v633 = vunpack.c.l.b16 %v562
        %v634 = vunpack.c.l.b16 %v563
        %v635 = vunpack.c.l.b16 %v564
        %v636 = vunpack.c.l.b16 %v565
        %v637 = vunpack.c.l.b16 %v566
        %v638 = vunpack.c.l.b16 %v567
        %v639 = vunpack.c.l.b16 %v568
        %v640 = vunpack.c.l.b16 %v569
        %v641 = vunpack.c.l.b16 %v570
        %v642 = vunpack.c.l.b16 %v571
        %v643 = vunpack.c.l.b16 %v572
        %v644 = vunpack.c.l.b16 %v573
        %v645 = vunpack.c.l.b16 %v574
        %v646 = vunpack.c.l.b16 %v575
        %v647 = vunpack.c.l.b16 %v576
        %v648 = vunpack.c.l.b16 %v577
        %v649 = vunpack.c.l.b16 %v578
        %v650 = vunpack.c.l.b16 %v579
        %v651 = vunpack.c.l.b16 %v580
        %v652 = vunpack.c.l.b16 %v581
        %v653 = vunpack.c.l.b16 %v582
        %v654 = vunpack.c.l.b16 %v583
        %v655 = vunpack.c.l.b16 %v584
        %v656 = vunpack.c.l.b16 %v585
        %v657 = vunpack.c.l.b16 %v586
        %v658 = vunpack.c.l.b16 %v587
        %v659 = vpack.c.b16 %v628, %v627
        %v660 = vpack.c.b16 %v630, %v629
        %v661 = vpack.c.b16 %v632, %v631
        %v662 = vpack.c.b16 %v634, %v633
        %v663 = vpack.c.b16 %v636, %v635
        %v664 = vpack.c.b16 %v638, %v637
        %v665 = vpack.c.b16 %v640, %v639
        %v666 = vpack.c.b16 %v642, %v641
        %v667 = vpack.c.b16 %v644, %v643
        %v668 = vpack.c.b16 %v646, %v645
        %v669 = vpack.c.b16 %v648, %v647
        %v670 = vpack.c.b16 %v650, %v649
        %v671 = vpack.c.b16 %v652, %v651
        %v672 = vpack.c.b16 %v654, %v653
        %v673 = vpack.c.b16 %v656, %v655
        %v674 = vpack.c.b16 %v658, %v657
        %691 = vmatprep.subr.bf16.mxu0 0
        %692 = vmatpush1.bf16.msra.mxu0 %v659
        %693 = vmatprep.subr.bf16.mxu0 0
        %694 = vmatpush1.bf16.msra.mxu0 %v660
        %695 = vmatprep.subr.bf16.mxu0 0
        %696 = vmatpush1.bf16.msra.mxu0 %v661
        %697 = vmatprep.subr.bf16.mxu0 0
        %698 = vmatpush1.bf16.msra.mxu0 %v662
        %699 = vmatprep.subr.bf16.mxu0 0
        %700 = vmatpush1.bf16.msra.mxu0 %v663
        %701 = vmatprep.subr.bf16.mxu0 0
        %702 = vmatpush1.bf16.msra.mxu0 %v664
        %703 = vmatprep.subr.bf16.mxu0 0
        %704 = vmatpush1.bf16.msra.mxu0 %v665
        %705 = vmatprep.subr.bf16.mxu0 0
        %706 = vmatpush1.bf16.msra.mxu0 %v666
        %707 = vmatprep.subr.bf16.mxu0 0
        %708 = vmatpush1.bf16.msra.mxu0 %v667
        %709 = vmatprep.subr.bf16.mxu0 0
        %710 = vmatpush1.bf16.msra.mxu0 %v668
        %711 = vmatprep.subr.bf16.mxu0 0
        %712 = vmatpush1.bf16.msra.mxu0 %v669
        %713 = vmatprep.subr.bf16.mxu0 0
        %714 = vmatpush1.bf16.msra.mxu0 %v670
        %715 = vmatprep.subr.bf16.mxu0 0
        %716 = vmatpush1.bf16.msra.mxu0 %v671
        %717 = vmatprep.subr.bf16.mxu0 0
        %718 = vmatpush1.bf16.msra.mxu0 %v672
        %719 = vmatprep.subr.bf16.mxu0 0
        %720 = vmatpush1.bf16.msra.mxu0 %v673
        %721 = vmatprep.subr.bf16.mxu0 0
        %722 = vmatpush1.bf16.msra.mxu0 %v674
        %723 = vmatprep.mubr.bf16.mxu0 %v549
        %724 = vmatmul.mubr.bf16.gmra.mrb[0].mxu0 %v548
        %v725 = vpop.f32.mrb[0].mxu0
        %v726 = vadd.f32 %v593, %v725
        %v727 = vpop.f32.mrb[0].mxu0
        %v728 = vpop.f32.mrb[0].mxu0
        %v729 = vadd.f32 %v593, %v728
        %v730 = vpop.f32.mrb[0].mxu0
        %731 = vmatprep.mubr.bf16.mxu0 %v551
        %732 = vmatmul.mubr.bf16.gmra.mrb[0].mxu0 %v550
        %v733 = vpop.f32.mrb[0].mxu0
        %v734 = vadd.f32 %v593, %v733
        %v735 = vpop.f32.mrb[0].mxu0
        %v736 = vpop.f32.mrb[0].mxu0
        %v737 = vadd.f32 %v593, %v736
        %v738 = vpop.f32.mrb[0].mxu0
        %739 = vmatprep.mubr.bf16.mxu0 %v553
        %740 = vmatmul.mubr.bf16.gmra.mrb[0].mxu0 %v552
        %v741 = vpop.f32.mrb[0].mxu0
        %v742 = vadd.f32 %v593, %v741
        %v743 = vpop.f32.mrb[0].mxu0
        %v744 = vpop.f32.mrb[0].mxu0
        %v745 = vadd.f32 %v593, %v744
        %v746 = vpop.f32.mrb[0].mxu0
        %747 = vmatprep.mubr.bf16.mxu0 %v555
        %748 = vmatmul.mubr.bf16.gmra.mrb[0].mxu0 %v554
        %v749 = vpop.f32.mrb[0].mxu0
        %v750 = vadd.f32 %v593, %v749
        %v751 = vpop.f32.mrb[0].mxu0
        %v752 = vpop.f32.mrb[0].mxu0
        %v753 = vadd.f32 %v593, %v752
        %v754 = vpop.f32.mrb[0].mxu0
        %755 = vdwg.mxu0
        %756 = vst [vmem:[%s271] sm:$0xff] %v726
        %757 = vst [vmem:[%s271 + $0x8] sm:$0xff] %v729
        %758 = vst [vmem:[%s271 + $0x10] sm:$0xff] %v734
        %759 = vst [vmem:[%s271 + $0x18] sm:$0xff] %v737
        %760 = vst [vmem:[%s271 + $0x20] sm:$0xff] %v742
        %761 = vst [vmem:[%s271 + $0x28] sm:$0xff] %v745
        %762 = vst [vmem:[%s271 + $0x30] sm:$0xff] %v750
        %763 = vst [vmem:[%s271 + $0x38] sm:$0xff] %v753
        %s764 = sand.u32 %s141, 1
        %s765 = scalar_lea.sflag [#allocation4], %s764
        %s766 = sand.u32 %s141, 1
        %s767 = smul.addr %s766, 64
        %s768 = scalar_lea.vmem [#allocation8], %s767
        // Predicated region
        $region53: #{tpu_custom_call.1} parent=39 // pred_check
          %p769 = pneg %p151
        $region54: #{tpu_custom_call.1} parent=39 // pred_check_branch
          %771 = sbr.rel (%p769) target = $region56
        $region55: #{tpu_custom_call.1} parent=39 // pred_region
          %s772 = smul.u32 8, %s23
          %s774 = ssub.s32 1024, 1024
          %775 = vsyncadd %s765, %s774
          %s776 = smul.addr %s772, 128
          %s777 = scalar_lea.hbm %s5, %s776
          %s778 = sshll.u32 %s768, 4
          %s779 = int_to_ptr.vmem [resolvable:$true] %s778
          %784 = dma.vmem_to_hbm [thread:$0]  %s779, 1024, %s777, %s765, 128, 128, 8
        $region56: #{tpu_custom_call.1} parent=39 // pred_fallthru
          _
      $region40: #{tpu_custom_call.1} parent=5 // pred_fallthru
        _
      %p785 = scmp.le.s32.totalorder 2, %s18
      // Predicated region
      $region57: #{tpu_custom_call.1} parent=5 // pred_check
        %p786 = pneg %p785
      $region58: #{tpu_custom_call.1} parent=5 // pred_check_branch
        %788 = sbr.rel (%p786) target = $region60
      $region59: #{tpu_custom_call.1} parent=5 // pred_region
        %s789 = ssub.s32 %s18, 2
        // Predicated region
        $region61: #{tpu_custom_call.1} parent=59 // pred_check
          %p790 = pneg %p157
        $region62: #{tpu_custom_call.1} parent=59 // pred_check_branch
          %792 = sbr.rel (%p790) target = $region64
        $region63: #{tpu_custom_call.1} parent=59 // pred_region
          %s793 = sand.u32 %s142, 1
          %s794 = scalar_lea.sflag [#allocation4], %s793
          %s795 = sand.u32 %s142, 1
          %s796 = smul.addr %s795, 64
          %s797 = scalar_lea.vmem [#allocation8], %s796
          %798 = dma.done %s794, 1024
        $region64: #{tpu_custom_call.1} parent=59 // pred_fallthru
          _
      $region60: #{tpu_custom_call.1} parent=5 // pred_fallthru
        _
    $region6: #{tpu_custom_call.1} parent=1 // loop_footer
      %s22 = sadd.s32 1, %s18
    $region7: #{tpu_custom_call.1} parent=1 // loop_footer_branch
      %17 = sbr.rel target = $region3
    $region8: #{tpu_custom_call.1} parent=1 // loop_exit
      _
    %799 = vsyncpa [#allocation3], 1
    %s800 = scalar_lea.sflag [#allocation3], 1
    %801 = vsyncpa %s800, 1
    %802 = vsyncpa [#allocation6], 1
    %803 = vsyncpa [#allocation4], 1
    %s804 = scalar_lea.sflag [#allocation4], 1
    %805 = vsyncpa %s804, 1

</llo_original>
